<compile_context>
chip_gen: v7x
topology: tpu7x:2x2x1
jax: 0.10.0
libtpu: 0.0.40
codegen_flags: <defaults>
</compile_context>

<pallas_src>
import jax
import jax.numpy as jnp
from jax.experimental import pallas as pl
from jax.experimental.pallas import tpu as pltpu

NEG_SLOPE = 0.2     # GraphLayer default negative_slope for leaky_relu
BN_EPS = 1e-5       # nn.BatchNorm1d default eps
MASK_VAL = -1e9     # additive mask for non-edges
VMEM_LIMIT = 32 * 1024 * 1024   # safe scoped-VMEM budget on v5e/v6e/v7x


def _round_up(a, b):
    return -(-a // b) * b


# --------------------------------------------------------------------------
# Kernel 1: attention softmax + aggregation, tiled over target-node rows.
# --------------------------------------------------------------------------
def gnn_attn_kernel(x_ref, w_ref, gi_ref, gj_ref, adj_ref, bias_ref,
                    out_ref, h_scr):
    # h = x @ W computed once (step 0) and kept resident in VMEM scratch.
    @pl.when(pl.program_id(0) == 0)
    def _():
        h = jnp.dot(x_ref[...].astype(jnp.bfloat16),
                    w_ref[...].astype(jnp.bfloat16),
                    preferred_element_type=jnp.float32)
        h_scr[...] = h.astype(jnp.bfloat16)

    # Attention logits for this row tile: alpha(j->i) = gi[i] + gj[j].
    scores = gi_ref[...] + gj_ref[...]                              # (TM, Np)
    scores = jnp.where(scores >= 0.0, scores, NEG_SLOPE * scores)   # leaky_relu
    scores = scores + adj_ref[...].astype(jnp.float32)              # additive mask

    # Masked row softmax (== PyG scatter softmax over incoming edges).
    m = jnp.max(scores, axis=-1, keepdims=True)
    e = jnp.exp(scores - m)                    # masked entries underflow to 0
    denom = jnp.sum(e, axis=-1, keepdims=True)
    alpha = e * pl.reciprocal(denom, approx=True)

    # Aggregate over source nodes, add bias.
    out = jnp.dot(alpha.astype(jnp.bfloat16), h_scr[...],
                  preferred_element_type=jnp.float32)
    out_ref[...] = out + bias_ref[...]


# --------------------------------------------------------------------------
# Kernel 2: BatchNorm1d (training-mode batch stats) + ReLU, tiled over
# feature columns (stats are per-feature over all nodes, so column tiles are
# independent -> "parallel").
# --------------------------------------------------------------------------
def bn_relu_kernel(x_ref, gamma_ref, beta_ref, out_ref):
    x = x_ref[...]
    n = x.shape[0]
    mean = jnp.sum(x, axis=0, keepdims=True) * (1.0 / n)
    d = x - mean
    var = jnp.sum(d * d, axis=0, keepdims=True) * (1.0 / n)   # biased variance
    y = d * jax.lax.rsqrt(var + BN_EPS)
    y = y * gamma_ref[...] + beta_ref[...]
    out_ref[...] = jnp.maximum(y, 0.0)


# --------------------------------------------------------------------------
# Wrapper
# --------------------------------------------------------------------------
def gnn_layer_forward(x, edge_index, embedding, params, *, row_tile=128):
    """x: (N, Cin) f32, edge_index: (2, E) int32 [src, dst], embedding: (N, D)."""
    N, in_c = x.shape
    D = params["w"].shape[1]
    D_pad = _round_up(D, 128)

    tm = _round_up(min(row_tile, _round_up(N, 8)), 8)
    n_pad = _round_up(N, tm)
    n_tiles = n_pad // tm

    # --- adjacency additive mask: 0.0 where edge j->i (incl. self loop), else -1e9.
    # (remove_self_loops + add_self_loops == force diagonal to 1.)
    src, dst = edge_index[0], edge_index[1]
    mask = jnp.zeros((n_pad, n_pad), jnp.float32).at[dst, src].set(1.0)
    diag = jnp.arange(N)
    mask = mask.at[diag, diag].set(1.0)
    adj_bias = jnp.where(mask > 0.0, 0.0, MASK_VAL).astype(jnp.bfloat16)

    # --- per-node attention logit pieces, precomputed as cheap matvecs.
    w = params["w"]                                         # (Cin, D)
    gi = x @ (w @ params["att_i"].T) + embedding @ params["att_em_i"].T   # (N,1)
    gj = x @ (w @ params["att_j"].T) + embedding @ params["att_em_j"].T   # (N,1)
    gi = jnp.pad(gi, ((0, n_pad - N), (0, 0)))
    gj = jnp.pad(gj, ((0, n_pad - N), (0, 0))).T            # (1, n_pad)

    # --- lane-dense (128-wide) feature padding.
    x_p = jnp.pad(x, ((0, n_pad - N), (0, 0)))
    w_p = jnp.pad(w, ((0, 0), (0, D_pad - D)))
    bias_p = jnp.pad(params["bias"], ((0, 0), (0, D_pad - D)))
    gamma_p = jnp.pad(params["gamma"], ((0, 0), (0, D_pad - D)),
                      constant_values=1.0)
    beta_p = jnp.pad(params["beta"], ((0, 0), (0, D_pad - D)))

    # --- pass 1: attention + aggregation, row-tiled & pipelined.
    agg = pl.pallas_call(
        gnn_attn_kernel,
        grid_spec=pltpu.PrefetchScalarGridSpec(
            num_scalar_prefetch=0,
            grid=(n_tiles,),
            in_specs=[
                pl.BlockSpec((n_pad, in_c), lambda i: (0, 0)),   # x (resident)
                pl.BlockSpec((in_c, D_pad), lambda i: (0, 0)),   # W (resident)
                pl.BlockSpec((tm, 1), lambda i: (i, 0)),         # gi row tile
                pl.BlockSpec((1, n_pad), lambda i: (0, 0)),      # gj (resident)
                pl.BlockSpec((tm, n_pad), lambda i: (i, 0)),     # adj bias tile
                pl.BlockSpec((1, D_pad), lambda i: (0, 0)),      # bias
            ],
            out_specs=pl.BlockSpec((tm, D_pad), lambda i: (i, 0)),
            scratch_shapes=[pltpu.VMEM((n_pad, D_pad), jnp.bfloat16)],
        ),
        out_shape=jax.ShapeDtypeStruct((n_pad, D_pad), jnp.float32),
        compiler_params=pltpu.CompilerParams(
            dimension_semantics=("arbitrary",),   # h scratch carried from step 0
            vmem_limit_bytes=VMEM_LIMIT),
    )(x_p, w_p, gi, gj, adj_bias, bias_p)

    agg = agg[:N]   # drop padded target rows before batch statistics

    # --- pass 2: BatchNorm (batch stats) + ReLU, feature-column tiled.
    out = pl.pallas_call(
        bn_relu_kernel,
        grid_spec=pltpu.PrefetchScalarGridSpec(
            num_scalar_prefetch=0,
            grid=(D_pad // 128,),
            in_specs=[
                pl.BlockSpec((N, 128), lambda j: (0, j)),
                pl.BlockSpec((1, 128), lambda j: (0, j)),
                pl.BlockSpec((1, 128), lambda j: (0, j)),
            ],
            out_specs=pl.BlockSpec((N, 128), lambda j: (0, j)),
        ),
        out_shape=jax.ShapeDtypeStruct((N, D_pad), jnp.float32),
        compiler_params=pltpu.CompilerParams(
            dimension_semantics=("parallel",),
            vmem_limit_bytes=VMEM_LIMIT),
    )(agg, gamma_p, beta_p)

    return out[:, :D]


if __name__ == "__main__":
    N, IN_C, OUT_C = 16, 8, 32   # node_num, in_channel, out_channel (heads=1)

    key = jax.random.PRNGKey(0)
    ks = jax.random.split(key, 8)

    x = jax.random.normal(ks[0], (N, IN_C), jnp.float32)
    embedding = jax.random.normal(ks[1], (N, OUT_C), jnp.float32)

    # edge_index (2, E): each node receives edges from its 3 ring-neighbours.
    src, dst = [], []
    for i in range(N):
        for d in (1, 2, 3):
            src.append((i + d) % N)
            dst.append(i)
    edge_index = jnp.array([src, dst], dtype=jnp.int32)

    def glorot(k, shape):
        lim = (6.0 / (shape[0] + shape[1])) ** 0.5
        return jax.random.uniform(k, shape, jnp.float32, -lim, lim)

    # NOTE: GraphLayer.reset_parameters zero-inits att_em_* and bias; we use
    # small deterministic random values instead so those paths are exercised.
    params = dict(
        w=glorot(ks[2], (IN_C, OUT_C)),          # lin.weight^T
        att_i=glorot(ks[3], (1, OUT_C)),
        att_j=glorot(ks[4], (1, OUT_C)),
        att_em_i=0.1 * glorot(ks[5], (1, OUT_C)),
        att_em_j=0.1 * glorot(ks[6], (1, OUT_C)),
        bias=0.1 * glorot(ks[7], (1, OUT_C)),
        gamma=jnp.ones((1, OUT_C), jnp.float32),  # BatchNorm1d weight init
        beta=jnp.zeros((1, OUT_C), jnp.float32),  # BatchNorm1d bias init
    )

    # row_tile=8 -> 2 grid steps, exercising the pipelined row tiling.
    out = gnn_layer_forward(x, edge_index, embedding, params, row_tile=8)
    out = jax.block_until_ready(out)

    assert out.shape == (N, OUT_C)
    assert bool(jnp.all(jnp.isfinite(out)))
    assert bool(jnp.all(out >= 0.0))   # ReLU output
    print("KERNEL_OK")
</pallas_src>

<mosaic_0001>
module attributes {stable_mosaic.version = 11 : i64} {
  func.func @gnn_attn_kernel(%arg0: i32, %arg1: memref<16x8xf32, #tpu.memory_space<vmem>>, %arg2: memref<8x128xf32, #tpu.memory_space<vmem>>, %arg3: memref<8x1xf32, #tpu.memory_space<vmem>>, %arg4: memref<1x16xf32, #tpu.memory_space<vmem>>, %arg5: memref<8x16xbf16, #tpu.memory_space<vmem>>, %arg6: memref<1x128xf32, #tpu.memory_space<vmem>>, %arg7: memref<8x128xf32, #tpu.memory_space<vmem>>, %arg8: memref<16x128xbf16, #tpu.memory_space<vmem>>) attributes {dimension_semantics = [#tpu.dimension_semantics<arbitrary>], iteration_bounds = array<i64: 2>, scalar_prefetch = 0 : i64, scratch_operands = 1 : i64, tpu.core_type = #tpu.core_type<tc>, window_params = [{pipeline_mode = #tpu.pipeline_mode<synchronous>, transform_indices = @transform_0, window_bounds = array<i64: 16, 8>}, {pipeline_mode = #tpu.pipeline_mode<synchronous>, transform_indices = @transform_1, window_bounds = array<i64: 8, 128>}, {transform_indices = @transform_2, window_bounds = array<i64: 8, 1>}, {pipeline_mode = #tpu.pipeline_mode<synchronous>, transform_indices = @transform_3, window_bounds = array<i64: 1, 16>}, {transform_indices = @transform_4, window_bounds = array<i64: 8, 16>}, {pipeline_mode = #tpu.pipeline_mode<synchronous>, transform_indices = @transform_5, window_bounds = array<i64: 1, 128>}, {transform_indices = @transform_6, window_bounds = array<i64: 8, 128>}]} {
    %c0_i32 = arith.constant 0 : i32
    %0 = arith.cmpi eq, %arg0, %c0_i32 : i32
    %1 = arith.extui %0 : i1 to i32
    %c0_i32_0 = arith.constant 0 : i32
    %2 = arith.cmpi ne, %1, %c0_i32_0 : i32
    scf.if %2 {
      %c0_16 = arith.constant 0 : index
      %c0_17 = arith.constant 0 : index
      %33 = vector.load %arg1[%c0_16, %c0_17] : memref<16x8xf32, #tpu.memory_space<vmem>>, vector<16x8xf32>
      %34 = arith.truncf %33 : vector<16x8xf32> to vector<16x8xbf16>
      %c0_18 = arith.constant 0 : index
      %c0_19 = arith.constant 0 : index
      %35 = vector.load %arg2[%c0_18, %c0_19] : memref<8x128xf32, #tpu.memory_space<vmem>>, vector<8x128xf32>
      %36 = arith.truncf %35 : vector<8x128xf32> to vector<8x128xbf16>
      %cst_20 = arith.constant dense<0.000000e+00> : vector<16x128xf32>
      %37 = tpu.matmul %34, %36, %cst_20 {dimension_numbers = #tpu.dot_dimension_numbers<[1], [0], [0], [1], [0, 0, 1, 1], [], []>} : vector<16x8xbf16>, vector<8x128xbf16>, vector<16x128xf32> -> vector<16x128xf32>
      %38 = arith.truncf %37 : vector<16x128xf32> to vector<16x128xbf16>
      %c0_21 = arith.constant 0 : index
      %c0_22 = arith.constant 0 : index
      %39 = vector.load %arg8[%c0_21, %c0_22] : memref<16x128xbf16, #tpu.memory_space<vmem>>, vector<16x128xbf16>
      tpu.vector_store %arg8[%c0_21, %c0_22], %38 {strides = array<i32>} : memref<16x128xbf16, #tpu.memory_space<vmem>>, vector<16x128xbf16>,
    } else {
    }
    %c0 = arith.constant 0 : index
    %c0_1 = arith.constant 0 : index
    %3 = vector.load %arg3[%c0, %c0_1] : memref<8x1xf32, #tpu.memory_space<vmem>>, vector<8x1xf32>
    %c0_2 = arith.constant 0 : index
    %c0_3 = arith.constant 0 : index
    %4 = vector.load %arg4[%c0_2, %c0_3] : memref<1x16xf32, #tpu.memory_space<vmem>>, vector<1x16xf32>
    %5 = vector.broadcast %3 : vector<8x1xf32> to vector<8x16xf32>
    %6 = vector.broadcast %4 : vector<1x16xf32> to vector<8x16xf32>
    %7 = arith.addf %5, %6 : vector<8x16xf32>
    %cst = arith.constant 0.000000e+00 : f32
    %8 = vector.broadcast %cst : f32 to vector<8x16xf32>
    %9 = arith.cmpf oge, %7, %8 : vector<8x16xf32>
    %cst_4 = arith.constant 2.000000e-01 : f32
    %10 = vector.broadcast %cst_4 : f32 to vector<8x16xf32>
    %11 = arith.mulf %10, %7 : vector<8x16xf32>
    %12 = arith.select %9, %7, %11 : vector<8x16xi1>, vector<8x16xf32>
    %c0_5 = arith.constant 0 : index
    %c0_6 = arith.constant 0 : index
    %13 = vector.load %arg5[%c0_5, %c0_6] : memref<8x16xbf16, #tpu.memory_space<vmem>>, vector<8x16xbf16>
    %14 = arith.extf %13 : vector<8x16xbf16> to vector<8x16xf32>
    %15 = arith.addf %12, %14 : vector<8x16xf32>
    %cst_7 = arith.constant dense<0xFF800000> : vector<8xf32>
    %16 = vector.multi_reduction <maximumf>, %15, %cst_7 [1] : vector<8x16xf32> to vector<8xf32>
    %17 = vector.shape_cast %16 : vector<8xf32> to vector<8x1xf32>
    %18 = vector.broadcast %17 : vector<8x1xf32> to vector<8x16xf32>
    %19 = arith.subf %15, %18 : vector<8x16xf32>
    %20 = math.exp %19 : vector<8x16xf32>
    %cst_8 = arith.constant dense<0.000000e+00> : vector<8xf32>
    %21 = vector.multi_reduction <add>, %20, %cst_8 [1] : vector<8x16xf32> to vector<8xf32>
    %22 = vector.shape_cast %21 : vector<8xf32> to vector<8x1xf32>
    %23 = tpu.reciprocal %22 {approx = true} : vector<8x1xf32> -> vector<8x1xf32>
    %24 = vector.broadcast %23 : vector<8x1xf32> to vector<8x16xf32>
    %25 = arith.mulf %20, %24 : vector<8x16xf32>
    %26 = arith.truncf %25 : vector<8x16xf32> to vector<8x16xbf16>
    %c0_9 = arith.constant 0 : index
    %c0_10 = arith.constant 0 : index
    %27 = vector.load %arg8[%c0_9, %c0_10] : memref<16x128xbf16, #tpu.memory_space<vmem>>, vector<16x128xbf16>
    %cst_11 = arith.constant dense<0.000000e+00> : vector<8x128xf32>
    %28 = tpu.matmul %26, %27, %cst_11 {dimension_numbers = #tpu.dot_dimension_numbers<[1], [0], [0], [1], [0, 0, 1, 1], [], []>} : vector<8x16xbf16>, vector<16x128xbf16>, vector<8x128xf32> -> vector<8x128xf32>
    %c0_12 = arith.constant 0 : index
    %c0_13 = arith.constant 0 : index
    %29 = vector.load %arg6[%c0_12, %c0_13] : memref<1x128xf32, #tpu.memory_space<vmem>>, vector<1x128xf32>
    %30 = vector.broadcast %29 : vector<1x128xf32> to vector<8x128xf32>
    %31 = arith.addf %28, %30 : vector<8x128xf32>
    %c0_14 = arith.constant 0 : index
    %c0_15 = arith.constant 0 : index
    %32 = vector.load %arg7[%c0_14, %c0_15] : memref<8x128xf32, #tpu.memory_space<vmem>>, vector<8x128xf32>
    tpu.vector_store %arg7[%c0_14, %c0_15], %31 {strides = array<i32>} : memref<8x128xf32, #tpu.memory_space<vmem>>, vector<8x128xf32>,
    return
  }
  func.func @transform_0(%arg0: i32) -> (i32, i32) {
    %c0_i32 = arith.constant 0 : i32
    %c0_i32_0 = arith.constant 0 : i32
    %c0_i32_1 = arith.constant 0 : i32
    return %c0_i32, %c0_i32_0 : i32, i32
  }
  func.func @transform_1(%arg0: i32) -> (i32, i32) {
    %c0_i32 = arith.constant 0 : i32
    %c0_i32_0 = arith.constant 0 : i32
    %c0_i32_1 = arith.constant 0 : i32
    return %c0_i32, %c0_i32_0 : i32, i32
  }
  func.func @transform_2(%arg0: i32) -> (i32, i32) {
    %c0_i32 = arith.constant 0 : i32
    %c0_i32_0 = arith.constant 0 : i32
    return %arg0, %c0_i32 : i32, i32
  }
  func.func @transform_3(%arg0: i32) -> (i32, i32) {
    %c0_i32 = arith.constant 0 : i32
    %c0_i32_0 = arith.constant 0 : i32
    %c0_i32_1 = arith.constant 0 : i32
    return %c0_i32, %c0_i32_0 : i32, i32
  }
  func.func @transform_4(%arg0: i32) -> (i32, i32) {
    %c0_i32 = arith.constant 0 : i32
    %c0_i32_0 = arith.constant 0 : i32
    return %arg0, %c0_i32 : i32, i32
  }
  func.func @transform_5(%arg0: i32) -> (i32, i32) {
    %c0_i32 = arith.constant 0 : i32
    %c0_i32_0 = arith.constant 0 : i32
    %c0_i32_1 = arith.constant 0 : i32
    return %c0_i32, %c0_i32_0 : i32, i32
  }
  func.func @transform_6(%arg0: i32) -> (i32, i32) {
    %c0_i32 = arith.constant 0 : i32
    %c0_i32_0 = arith.constant 0 : i32
    return %arg0, %c0_i32 : i32, i32
  }
}

</mosaic_0001>

<llo_original>
// kernel: tpu_custom_call.1
$region0: #{tpu_custom_call.1}
  #allocation0 [shape = 'u32[]', space=smem, size = 0x4, offset = 0x4, fixed_abs, tag = 'smem constant byte address 0x4 - core index']
  #allocation1 [shape = 'u32[144,128]{1,0:T(1,128)}', space=vmem, size = 0x12000, scoped, tag = 'internal scratch']
  #allocation2 [shape = 'bf16[16,128]{1,0:T(16,128)(2,1)}', space=vmem, size = 0x1000, scoped, tag = 'scratch operand']
  %s0 = inlined_call_operand.vmem [shape: f32[16,8], index: 0, kind: input, shape index: {}]
  %s1 = inlined_call_operand.vmem [shape: f32[8,128], index: 1, kind: input, shape index: {}]
  %s2 = inlined_call_operand.vmem [shape: f32[16,1], index: 2, kind: input, shape index: {}]
  %s3 = inlined_call_operand.vmem [shape: f32[1,16], index: 3, kind: input, shape index: {}]
  %s4 = inlined_call_operand.vmem [shape: bf16[16,16], index: 4, kind: input, shape index: {}]
  %s5 = inlined_call_operand.vmem [shape: f32[1,128], index: 5, kind: input, shape index: {}]
  %s6 = inlined_call_operand.hbm [shape: f32[16,128], index: 6, kind: output, shape index: {}]
  %s7 = sld [smem:[#allocation0]]
  $region61: #{tpu_custom_call.1} parent=0
    _
  %s9 = ssub.s32 1, %s7
  %s10 = scalar_select 0, %s9, %s7
  $region1: #{tpu_custom_call.1} parent=0
    #allocation3 [shape = 'u8[8192]{0}', space=vmem, size = 0x2000, scoped, tag = 'output window, operand 0']
    #allocation4 [shape = 's32[2]{0}', space=sflag, size = 0x8, scoped, tag = 'scoped memory for tpu_custom_call.1']
    %11 = vsyncpa [#allocation4], 0
    %s12 = scalar_lea.sflag [#allocation4], 1
    %13 = vsyncpa %s12, 0
    loop: start=0, step=1, limit=4
    $region2: #{tpu_custom_call.1} parent=1 // loop_pre_header
      _
    $region3: #{tpu_custom_call.1} parent=1 // loop_header
      %s15 = sphi 0, %s19
      %p16 = scmp.ge.s32.totalorder %s15, 4
      %s23 = sphi 0, %s23
      %s25 = sphi 0, %s23
      %s26 = sphi 0, %s25
      %s40 = sphi 0, %s26
      %s44 = sphi 0, %s44
      %s46 = sphi 0, %s44
      %s47 = sphi 0, %s46
      %s61 = sphi 0, %s47
      %s67 = sphi 0, %s69
      %s70 = sphi 0, %s67
      %s71 = sphi 0, %s70
      %s87 = sphi 0, %s71
      %s91 = sphi 0, %s91
      %s93 = sphi 0, %s91
      %s94 = sphi 0, %s93
      %s108 = sphi 0, %s94
      %s114 = sphi 0, %s116
      %s117 = sphi 0, %s114
      %s118 = sphi 0, %s117
      %s134 = sphi 0, %s118
      %s138 = sphi 0, %s138
      %s140 = sphi 0, %s138
      %s141 = sphi 0, %s140
      %s155 = sphi 0, %s141
      %s161 = sphi 0, %s163
      %s164 = sphi 0, %s161
      %s165 = sphi 0, %s164
      %s181 = sphi 0, %s165
    $region4: #{tpu_custom_call.1} parent=1 // loop_header_branch
      %18 = sbr.rel (%p16) target = $region8
    $region5: #{tpu_custom_call.1} parent=1 // loop_body
      %s20 = ssub.s32 %s15, 1
      %s21 = ssub.s32 %s15, 2
      %s22 = sadd.s32 %s15, 1
      %s24 = sadd.s32 %s23, 1
      %p27 = scmp.eq.s32.totalorder %s15, 1
      %p28 = scmp.ne.s32.totalorder %s23, %s25
      %p29 = scmp.eq.s32.totalorder %s15, 0
      %p30 = por %p28, %p29
      %p31 = scmp.ne.s32.totalorder %s23, %s25
      %p32 = scmp.eq.s32.totalorder %s20, 1
      %p33 = por %p31, %p32
      %p34 = scmp.ne.s32.totalorder %s25, %s26
      %p35 = scmp.eq.s32.totalorder %s20, 0
      %p36 = por %p34, %p35
      %p37 = scmp.ne.s32.totalorder %s25, %s26
      %p38 = scmp.eq.s32.totalorder %s21, 1
      %p39 = por %p37, %p38
      %p41 = scmp.ne.s32.totalorder %s26, %s40
      %p42 = scmp.eq.s32.totalorder %s21, 0
      %p43 = por %p41, %p42
      %s45 = sadd.s32 %s44, 1
      %p48 = scmp.eq.s32.totalorder %s15, 1
      %p49 = scmp.ne.s32.totalorder %s44, %s46
      %p50 = scmp.eq.s32.totalorder %s15, 0
      %p51 = por %p49, %p50
      %p52 = scmp.ne.s32.totalorder %s44, %s46
      %p53 = scmp.eq.s32.totalorder %s20, 1
      %p54 = por %p52, %p53
      %p55 = scmp.ne.s32.totalorder %s46, %s47
      %p56 = scmp.eq.s32.totalorder %s20, 0
      %p57 = por %p55, %p56
      %p58 = scmp.ne.s32.totalorder %s46, %s47
      %p59 = scmp.eq.s32.totalorder %s21, 1
      %p60 = por %p58, %p59
      %p62 = scmp.ne.s32.totalorder %s47, %s61
      %p63 = scmp.eq.s32.totalorder %s21, 0
      %p64 = por %p62, %p63
      %s65 = ssub.s32 %s15, %s22
      %p66 = scmp.eq.s32.totalorder %s65, 0
      %s68 = sadd.s32 %s67, 1
      %s69 = scalar_select %p66, %s67, %s68
      %p72 = pneg %p66
      %p73 = scmp.eq.s32.totalorder %s15, 1
      %p74 = por %p72, %p73
      %p75 = scmp.ne.s32.totalorder %s67, %s70
      %p76 = scmp.eq.s32.totalorder %s15, 0
      %p77 = por %p75, %p76
      %p78 = scmp.ne.s32.totalorder %s67, %s70
      %p79 = scmp.eq.s32.totalorder %s20, 1
      %p80 = por %p78, %p79
      %p81 = scmp.ne.s32.totalorder %s70, %s71
      %p82 = scmp.eq.s32.totalorder %s20, 0
      %p83 = por %p81, %p82
      %p84 = scmp.ne.s32.totalorder %s70, %s71
      %p85 = scmp.eq.s32.totalorder %s21, 1
      %p86 = por %p84, %p85
      %p88 = scmp.ne.s32.totalorder %s71, %s87
      %p89 = scmp.eq.s32.totalorder %s21, 0
      %p90 = por %p88, %p89
      %s92 = sadd.s32 %s91, 1
      %p95 = scmp.eq.s32.totalorder %s15, 1
      %p96 = scmp.ne.s32.totalorder %s91, %s93
      %p97 = scmp.eq.s32.totalorder %s15, 0
      %p98 = por %p96, %p97
      %p99 = scmp.ne.s32.totalorder %s91, %s93
      %p100 = scmp.eq.s32.totalorder %s20, 1
      %p101 = por %p99, %p100
      %p102 = scmp.ne.s32.totalorder %s93, %s94
      %p103 = scmp.eq.s32.totalorder %s20, 0
      %p104 = por %p102, %p103
      %p105 = scmp.ne.s32.totalorder %s93, %s94
      %p106 = scmp.eq.s32.totalorder %s21, 1
      %p107 = por %p105, %p106
      %p109 = scmp.ne.s32.totalorder %s94, %s108
      %p110 = scmp.eq.s32.totalorder %s21, 0
      %p111 = por %p109, %p110
      %s112 = ssub.s32 %s15, %s22
      %p113 = scmp.eq.s32.totalorder %s112, 0
      %s115 = sadd.s32 %s114, 1
      %s116 = scalar_select %p113, %s114, %s115
      %p119 = pneg %p113
      %p120 = scmp.eq.s32.totalorder %s15, 1
      %p121 = por %p119, %p120
      %p122 = scmp.ne.s32.totalorder %s114, %s117
      %p123 = scmp.eq.s32.totalorder %s15, 0
      %p124 = por %p122, %p123
      %p125 = scmp.ne.s32.totalorder %s114, %s117
      %p126 = scmp.eq.s32.totalorder %s20, 1
      %p127 = por %p125, %p126
      %p128 = scmp.ne.s32.totalorder %s117, %s118
      %p129 = scmp.eq.s32.totalorder %s20, 0
      %p130 = por %p128, %p129
      %p131 = scmp.ne.s32.totalorder %s117, %s118
      %p132 = scmp.eq.s32.totalorder %s21, 1
      %p133 = por %p131, %p132
      %p135 = scmp.ne.s32.totalorder %s118, %s134
      %p136 = scmp.eq.s32.totalorder %s21, 0
      %p137 = por %p135, %p136
      %s139 = sadd.s32 %s138, 1
      %p142 = scmp.eq.s32.totalorder %s15, 1
      %p143 = scmp.ne.s32.totalorder %s138, %s140
      %p144 = scmp.eq.s32.totalorder %s15, 0
      %p145 = por %p143, %p144
      %p146 = scmp.ne.s32.totalorder %s138, %s140
      %p147 = scmp.eq.s32.totalorder %s20, 1
      %p148 = por %p146, %p147
      %p149 = scmp.ne.s32.totalorder %s140, %s141
      %p150 = scmp.eq.s32.totalorder %s20, 0
      %p151 = por %p149, %p150
      %p152 = scmp.ne.s32.totalorder %s140, %s141
      %p153 = scmp.eq.s32.totalorder %s21, 1
      %p154 = por %p152, %p153
      %p156 = scmp.ne.s32.totalorder %s141, %s155
      %p157 = scmp.eq.s32.totalorder %s21, 0
      %p158 = por %p156, %p157
      %s159 = ssub.s32 %s15, %s22
      %p160 = scmp.eq.s32.totalorder %s159, 0
      %s162 = sadd.s32 %s161, 1
      %s163 = scalar_select %p160, %s161, %s162
      %p166 = pneg %p160
      %p167 = scmp.eq.s32.totalorder %s15, 1
      %p168 = por %p166, %p167
      %p169 = scmp.ne.s32.totalorder %s161, %s164
      %p170 = scmp.eq.s32.totalorder %s15, 0
      %p171 = por %p169, %p170
      %p172 = scmp.ne.s32.totalorder %s161, %s164
      %p173 = scmp.eq.s32.totalorder %s20, 1
      %p174 = por %p172, %p173
      %p175 = scmp.ne.s32.totalorder %s164, %s165
      %p176 = scmp.eq.s32.totalorder %s20, 0
      %p177 = por %p175, %p176
      %p178 = scmp.ne.s32.totalorder %s164, %s165
      %p179 = scmp.eq.s32.totalorder %s21, 1
      %p180 = por %p178, %p179
      %p182 = scmp.ne.s32.totalorder %s165, %s181
      %p183 = scmp.eq.s32.totalorder %s21, 0
      %p184 = por %p182, %p183
      %p185 = scmp.le.s32.totalorder 1, %s15
      %p186 = scmp.lt.s32.totalorder %s15, 3
      %p187 = pnand %p185, %p186
      %p188 = pneg %p187
      // Predicated region
      $region9: #{tpu_custom_call.1} parent=5 // pred_check
        _
      $region10: #{tpu_custom_call.1} parent=5 // pred_check_branch
        %190 = sbr.rel (%p187) target = $region12
      $region11: #{tpu_custom_call.1} parent=5 // pred_region
        %s191 = ssub.s32 %s15, 1
        // Predicated region
        $region13: #{tpu_custom_call.1} parent=11 // pred_check
          %p192 = pneg %p36
        $region14: #{tpu_custom_call.1} parent=11 // pred_check_branch
          %194 = sbr.rel (%p192) target = $region16
        $region15: #{tpu_custom_call.1} parent=11 // pred_region
          _
        $region16: #{tpu_custom_call.1} parent=11 // pred_fallthru
          _
        // Predicated region
        $region17: #{tpu_custom_call.1} parent=11 // pred_check
          %p195 = pneg %p57
        $region18: #{tpu_custom_call.1} parent=11 // pred_check_branch
          %197 = sbr.rel (%p195) target = $region20
        $region19: #{tpu_custom_call.1} parent=11 // pred_region
          _
        $region20: #{tpu_custom_call.1} parent=11 // pred_fallthru
          _
        // Predicated region
        $region21: #{tpu_custom_call.1} parent=11 // pred_check
          %p198 = pneg %p104
        $region22: #{tpu_custom_call.1} parent=11 // pred_check_branch
          %200 = sbr.rel (%p198) target = $region24
        $region23: #{tpu_custom_call.1} parent=11 // pred_region
          _
        $region24: #{tpu_custom_call.1} parent=11 // pred_fallthru
          _
        // Predicated region
        $region25: #{tpu_custom_call.1} parent=11 // pred_check
          %p201 = pneg %p151
        $region26: #{tpu_custom_call.1} parent=11 // pred_check_branch
          %203 = sbr.rel (%p201) target = $region28
        $region27: #{tpu_custom_call.1} parent=11 // pred_region
          _
        $region28: #{tpu_custom_call.1} parent=11 // pred_fallthru
          _
      $region12: #{tpu_custom_call.1} parent=5 // pred_fallthru
        _
      %p204 = scmp.lt.s32.totalorder %s15, 2
      // Predicated region
      $region29: #{tpu_custom_call.1} parent=5 // pred_check
        %p205 = pneg %p204
      $region30: #{tpu_custom_call.1} parent=5 // pred_check_branch
        %207 = sbr.rel (%p205) target = $region32
      $region31: #{tpu_custom_call.1} parent=5 // pred_region
        // Predicated region
        $region33: #{tpu_custom_call.1} parent=31 // pred_check
          %p208 = pneg %p77
        $region34: #{tpu_custom_call.1} parent=31 // pred_check_branch
          %210 = sbr.rel (%p208) target = $region36
        $region35: #{tpu_custom_call.1} parent=31 // pred_region
          %p211 = scmp.lt.s32.totalorder %s15, 1
          %s212 = scalar_select %p211, %s15, 1
          %s213 = smul.addr %s212, 8
          %s214 = scalar_lea.vmem %s2, %s213
        $region36: #{tpu_custom_call.1} parent=31 // pred_fallthru
          _
        // Predicated region
        $region37: #{tpu_custom_call.1} parent=31 // pred_check
          %p215 = pneg %p124
        $region38: #{tpu_custom_call.1} parent=31 // pred_check_branch
          %217 = sbr.rel (%p215) target = $region40
        $region39: #{tpu_custom_call.1} parent=31 // pred_region
          %p218 = scmp.lt.s32.totalorder %s15, 1
          %s219 = scalar_select %p218, %s15, 1
          %s220 = smul.addr %s219, 4
          %s221 = scalar_lea.vmem %s4, %s220
        $region40: #{tpu_custom_call.1} parent=31 // pred_fallthru
          _
      $region32: #{tpu_custom_call.1} parent=5 // pred_fallthru
        _
      %p222 = scmp.le.s32.totalorder 1, %s15
      %p223 = scmp.lt.s32.totalorder %s15, 3
      %p224 = pnand %p222, %p223
      %p225 = pneg %p224
      // Predicated region
      $region41: #{tpu_custom_call.1} parent=5 // pred_check
        _
      $region42: #{tpu_custom_call.1} parent=5 // pred_check_branch
        %227 = sbr.rel (%p224) target = $region44
      $region43: #{tpu_custom_call.1} parent=5 // pred_region
        %s228 = ssub.s32 %s15, 1
        %p229 = pneg %p36
        %p230 = pneg %p33
        %p231 = pneg %p57
        %p232 = pneg %p54
        %p233 = scmp.lt.s32.totalorder %s20, 1
        %s234 = scalar_select %p233, %s20, 1
        %s235 = smul.addr %s234, 8
        %s236 = scalar_lea.vmem %s2, %s235
        %p237 = pneg %p83
        %p238 = pneg %p80
        %p239 = pneg %p104
        %p240 = pneg %p101
        %p241 = scmp.lt.s32.totalorder %s20, 1
        %s242 = scalar_select %p241, %s20, 1
        %s243 = smul.addr %s242, 4
        %s244 = scalar_lea.vmem %s4, %s243
        %p245 = pneg %p130
        %p246 = pneg %p127
        %p247 = pneg %p151
        %p248 = pneg %p148
        %p249 = pneg %p177
        %p250 = pneg %p174
        %s251 = sand.u32 %s164, 1
        %s252 = scalar_lea.sflag [#allocation4], %s251
        %s253 = sand.u32 %s164, 1
        %s254 = smul.addr %s253, 8
        %s255 = scalar_lea.vmem [#allocation3], %s254
        %p256 = scmp.lt.s32.totalorder %s20, 1
        %s257 = scalar_select %p256, %s20, 1
        %s258 = smul.addr %s257, 8
        %s259 = scalar_lea.vmem %s2, %s258
        %p260 = scmp.lt.s32.totalorder %s20, 1
        %s261 = scalar_select %p260, %s20, 1
        %s262 = smul.addr %s261, 4
        %s263 = scalar_lea.vmem %s4, %s262
        %p265 = scmp.eq.s32.totalorder %s20, 0
        // Predicated region
        $region45: #{tpu_custom_call.1} parent=43 // pred_check
          %p266 = pneg %p265
        $region46: #{tpu_custom_call.1} parent=43 // pred_check_branch
          %268 = sbr.rel (%p266) target = $region48
        $region47: #{tpu_custom_call.1} parent=43 // pred_region
          %v269 = vld [vmem:[%s0] sm:$0xff]
          %v270 = vld [vmem:[%s0 + $0x8] sm:$0xff]
          %v271 = vpack.c.bf16 %v270, %v269
          %v272 = vld [vmem:[%s1] sm:$0xff]
          %v273 = vpack.c.bf16 %v272, %v272
          %vm274 = vcmask 64512
          %v276 = vsel %vm274, %v271, 0
          %vm278 = vcmask 1043456
          %v280 = vsel %vm278, %v273, 0
          %282 = vmatprep.subr.bf16.mxu0 0
          %283 = vmatpush1.bf16.msra.mxu0 %v280
          %284 = vmatprep.subr.bf16.mxu0 0
          %285 = vmatpush1.bf16.msra.mxu0 0
          %286 = vmatprep.subr.bf16.mxu0 0
          %287 = vmatpush1.bf16.msra.mxu0 0
          %288 = vmatprep.subr.bf16.mxu0 0
          %289 = vmatpush1.bf16.msra.mxu0 0
          %290 = vmatprep.subr.bf16.mxu0 0
          %291 = vmatpush1.bf16.msra.mxu0 0
          %292 = vmatprep.subr.bf16.mxu0 0
          %293 = vmatpush1.bf16.msra.mxu0 0
          %294 = vmatprep.subr.bf16.mxu0 0
          %295 = vmatpush1.bf16.msra.mxu0 0
          %296 = vmatprep.subr.bf16.mxu0 0
          %297 = vmatpush1.bf16.msra.mxu0 0
          %298 = vmatprep.subr.bf16.mxu0 0
          %299 = vmatpush1.bf16.msra.mxu0 0
          %300 = vmatprep.subr.bf16.mxu0 0
          %301 = vmatpush1.bf16.msra.mxu0 0
          %302 = vmatprep.subr.bf16.mxu0 0
          %303 = vmatpush1.bf16.msra.mxu0 0
          %304 = vmatprep.subr.bf16.mxu0 0
          %305 = vmatpush1.bf16.msra.mxu0 0
          %306 = vmatprep.subr.bf16.mxu0 0
          %307 = vmatpush1.bf16.msra.mxu0 0
          %308 = vmatprep.subr.bf16.mxu0 0
          %309 = vmatpush1.bf16.msra.mxu0 0
          %310 = vmatprep.subr.bf16.mxu0 0
          %311 = vmatpush1.bf16.msra.mxu0 0
          %312 = vmatprep.subr.bf16.mxu0 0
          %313 = vmatpush1.bf16.msra.mxu0 0
          %314 = vmatprep.mubr.bf16.mxu0 0
          %315 = vmatmul.mubr.bf16.gmra.mrb[0].mxu0 %v276
          %v316 = vpop.f32.mrb[0].mxu0
          %v317 = vadd.f32 0.0, %v316
          %v318 = vpop.f32.mrb[0].mxu0
          %v319 = vpop.f32.mrb[0].mxu0
          %v320 = vadd.f32 0.0, %v319
          %v321 = vpop.f32.mrb[0].mxu0
          %322 = vdwg.mxu0
          %v323 = vpack.c.bf16 %v320, %v317
          %324 = vst [vmem:[#allocation2] sm:$0xff] %v323
        $region48: #{tpu_custom_call.1} parent=43 // pred_fallthru
          _
        %v325 = vld [vmem:[%s259] sm:$0xff]
        %v326 = vld [vmem:[%s3] sm:$0x1]
        %328 = vset.pattern.permute.xlu0 0
        %329 = vperm.xlu0 %328, %v325
        %v330 = vpop.permute.xlu0 %329
        %v333 = vlaneseq
        %v334 = vshrl.u32 %v333, 7
        %v335 = vsub.s32 0, %v334
        %v336 = vrot.slane %v326, %v335
        %v338 = vadd.f32 %v330, %v336
        %vm339 = vcmp.ge.f32.partialorder %v338, 0.0
        %v340 = vmul.f32 %v338, 0.2
        %v341 = vsel %vm339, %v338, %v340
        %v342 = vld [vmem:[%s263] sm:$0xf]
        %v343 = vunpack.c.l.bf16 %v342
        %v344 = vadd.f32 %v341, %v343
        %vm345 = vcmask 130048
        %v346 = vsel %vm345, %v344, -inf
        %347 = vmax.xlane.f32.xlu0 %v346
        %v348 = vpop.xlane.xlu0 %347
        %v349 = vsub.f32 %v344, %v348
        %v350 = vmul.f32 %v349, 1.442695
        %v351 = vpow.pop %v350
        %v352 = vsel %vm345, %v351, 0.0
        %353 = vadd.xlane.f32.xlu0 %v352
        %v354 = vpop.xlane.xlu0 %353
        %v355 = vrcp.pop %v354
        %v356 = vmul.f32 %v351, %v355
        %v357 = vpack.c.bf16 %v356, %v356
        %v358 = vld [vmem:[#allocation2] sm:$0xff]
        %v359 = vld [vmem:[%s5] sm:$0x1]
        %v361 = vlaneseq
        %v362 = vshrl.u32 %v361, 7
        %v363 = vsub.s32 0, %v362
        %v364 = vrot.slane %v359, %v363
        %v367 = vsel %vm345, %v357, 0
        %369 = vmatprep.subr.bf16.mxu0 0
        %370 = vmatpush1.bf16.msra.mxu0 %v358
        %371 = vmatprep.subr.bf16.mxu0 0
        %372 = vmatpush1.bf16.msra.mxu0 0
        %373 = vmatprep.subr.bf16.mxu0 0
        %374 = vmatpush1.bf16.msra.mxu0 0
        %375 = vmatprep.subr.bf16.mxu0 0
        %376 = vmatpush1.bf16.msra.mxu0 0
        %377 = vmatprep.subr.bf16.mxu0 0
        %378 = vmatpush1.bf16.msra.mxu0 0
        %379 = vmatprep.subr.bf16.mxu0 0
        %380 = vmatpush1.bf16.msra.mxu0 0
        %381 = vmatprep.subr.bf16.mxu0 0
        %382 = vmatpush1.bf16.msra.mxu0 0
        %383 = vmatprep.subr.bf16.mxu0 0
        %384 = vmatpush1.bf16.msra.mxu0 0
        %385 = vmatprep.subr.bf16.mxu0 0
        %386 = vmatpush1.bf16.msra.mxu0 0
        %387 = vmatprep.subr.bf16.mxu0 0
        %388 = vmatpush1.bf16.msra.mxu0 0
        %389 = vmatprep.subr.bf16.mxu0 0
        %390 = vmatpush1.bf16.msra.mxu0 0
        %391 = vmatprep.subr.bf16.mxu0 0
        %392 = vmatpush1.bf16.msra.mxu0 0
        %393 = vmatprep.subr.bf16.mxu0 0
        %394 = vmatpush1.bf16.msra.mxu0 0
        %395 = vmatprep.subr.bf16.mxu0 0
        %396 = vmatpush1.bf16.msra.mxu0 0
        %397 = vmatprep.subr.bf16.mxu0 0
        %398 = vmatpush1.bf16.msra.mxu0 0
        %399 = vmatprep.subr.bf16.mxu0 0
        %400 = vmatpush1.bf16.msra.mxu0 0
        %401 = vmatprep.mubr.bf16.mxu0 0
        %402 = vmatmul.mubr.bf16.gmra.mrb[0].mxu0 %v367
        %v403 = vpop.f32.mrb[0].mxu0
        %v404 = vadd.f32 %v364, %v403
        %v405 = vpop.f32.mrb[0].mxu0
        %v406 = vpop.f32.mrb[0].mxu0
        %v407 = vpop.f32.mrb[0].mxu0
        %408 = vdwg.mxu0
        %409 = vst [vmem:[%s255] sm:$0xff] %v404
        %s410 = sand.u32 %s164, 1
        %s411 = scalar_lea.sflag [#allocation4], %s410
        %s412 = sand.u32 %s164, 1
        %s413 = smul.addr %s412, 8
        %s414 = scalar_lea.vmem [#allocation3], %s413
        // Predicated region
        $region49: #{tpu_custom_call.1} parent=43 // pred_check
          %p415 = pneg %p174
        $region50: #{tpu_custom_call.1} parent=43 // pred_check_branch
          %417 = sbr.rel (%p415) target = $region52
        $region51: #{tpu_custom_call.1} parent=43 // pred_region
          %s419 = ssub.s32 128, 128
          %420 = vsyncadd %s411, %s419
          %s421 = smul.addr %s20, 128
          %s422 = scalar_lea.hbm %s6, %s421
          %s424 = sshll.u32 %s414, 4
          %s425 = int_to_ptr.vmem [resolvable:$true] %s424
          %427 = dma.vmem_to_hbm [thread:$0]  %s425, 128, %s422, %s411
        $region52: #{tpu_custom_call.1} parent=43 // pred_fallthru
          _
      $region44: #{tpu_custom_call.1} parent=5 // pred_fallthru
        _
      %p428 = scmp.le.s32.totalorder 2, %s15
      // Predicated region
      $region53: #{tpu_custom_call.1} parent=5 // pred_check
        %p429 = pneg %p428
      $region54: #{tpu_custom_call.1} parent=5 // pred_check_branch
        %431 = sbr.rel (%p429) target = $region56
      $region55: #{tpu_custom_call.1} parent=5 // pred_region
        %s432 = ssub.s32 %s15, 2
        // Predicated region
        $region57: #{tpu_custom_call.1} parent=55 // pred_check
          %p433 = pneg %p180
        $region58: #{tpu_custom_call.1} parent=55 // pred_check_branch
          %435 = sbr.rel (%p433) target = $region60
        $region59: #{tpu_custom_call.1} parent=55 // pred_region
          %s436 = sand.u32 %s165, 1
          %s437 = scalar_lea.sflag [#allocation4], %s436
          %s438 = sand.u32 %s165, 1
          %s439 = smul.addr %s438, 8
          %s440 = scalar_lea.vmem [#allocation3], %s439
          %441 = dma.done %s437, 128
        $region60: #{tpu_custom_call.1} parent=55 // pred_fallthru
          _
      $region56: #{tpu_custom_call.1} parent=5 // pred_fallthru
        _
    $region6: #{tpu_custom_call.1} parent=1 // loop_footer
      %s19 = sadd.s32 1, %s15
    $region7: #{tpu_custom_call.1} parent=1 // loop_footer_branch
      %14 = sbr.rel target = $region3
    $region8: #{tpu_custom_call.1} parent=1 // loop_exit
      _
    %442 = vsyncpa [#allocation4], 1
    %s443 = scalar_lea.sflag [#allocation4], 1
    %444 = vsyncpa %s443, 1

</llo_original>
